<compile_context>
chip_gen: v7x
topology: tpu7x:2x2x1
jax: 0.10.0
libtpu: 0.0.40
codegen_flags: <defaults>
</compile_context>

<pallas_src>
import jax
import jax.numpy as jnp
from jax.experimental import pallas as pl
from jax.experimental.pallas import tpu as pltpu


def _d_block_kernel(eta_ref, x_ref, z_ref, d_ref, o_ref):
    """out = d - eta * (x - z); math in f32, result cast to the output dtype."""
    eta = eta_ref[0, 0]                       # f32 scalar from SMEM
    x = x_ref[...].astype(jnp.float32)
    z = z_ref[...].astype(jnp.float32)
    d = d_ref[...].astype(jnp.float32)
    o_ref[...] = (d - eta * (x - z)).astype(o_ref.dtype)


_LANE_WIDTHS = (4096, 2048, 1024, 512, 256, 128)  # lane-dense last-dim candidates
_MIN_TILES = 4        # keep the pipeline >= 4 grid steps when the tensor allows it


def _target_tile_bytes():
    """Per-generation bytes per array per tile.

    v7x (64 MiB VMEM, ~3.2 TB/s HBM): 4 MiB tiles so the ~0.35 us/grid-step
    overhead is <8% of step time.  v5e/v6e (128 MiB VMEM): 2 MiB tiles
    (16 MiB pipeline; vmem_limit_bytes is raised explicitly below).
    """
    try:
        info = pltpu.get_tpu_info()
        vmem = int(getattr(info, "vmem_capacity_bytes", 0) or 0)
    except Exception:
        vmem = 0
    if vmem and vmem <= (64 << 20):
        return 4 << 20
    return 2 << 20


def _choose_lanes(total):
    """Largest lane-dense width dividing `total`, preferring >= 8 rows so the
    slab has at least one full (8, lanes) sublane tile. None if ragged."""
    best = None
    for w in _LANE_WIDTHS:
        if total % w == 0:
            if best is None:
                best = w
            if total // w >= 8:
                return w
    return best


def _choose_tile_rows(rows, sublane, target_rows):
    """Row-tile size: multiple of `sublane` (or full extent), dividing `rows`
    evenly when possible, giving >= _MIN_TILES grid steps for tensors big
    enough to benefit from double-buffering / the v7x 2-TC split."""
    if rows <= 2 * sublane:
        return rows                            # tiny: single full-extent block
    upper = min(target_rows, max(sublane, rows // _MIN_TILES))
    upper = max(sublane, (upper // sublane) * sublane)
    best_even = best_any = None
    t = upper
    while t >= sublane:
        if rows % t == 0:
            if best_any is None:
                best_any = t
            if (rows // t) % 2 == 0:           # even step count: both v7x TCs busy
                best_even = t
                break
        t -= sublane
    if best_even is not None and (best_any is None or 2 * best_even >= best_any):
        return best_even
    if best_any is not None:
        return best_any
    return upper                               # partial last block (Pallas masks it)


def d_block_forward(x, z, d, eta, *, donate_d=False):
    """Pallas implementation of D_block.forward(x, z, d) = d - eta * (x - z)."""
    assert x.shape == z.shape == d.shape, "x, z, d must share a shape"
    assert x.dtype == z.dtype == d.dtype, "x, z, d must share a dtype"
    orig_shape = x.shape
    dtype = x.dtype
    itemsize = jnp.dtype(dtype).itemsize
    total = int(x.size)

    eta_f32 = jnp.asarray(eta, dtype=jnp.float32).reshape(-1)[0]

    if total < 128:
        # Degenerate size: a kernel launch is pure overhead; keep f32 math.
        out = (d.astype(jnp.float32)
               - eta_f32 * (x.astype(jnp.float32) - z.astype(jnp.float32)))
        return out.astype(dtype)

    eta_smem = eta_f32.reshape(1, 1)

    lanes = _choose_lanes(total)
    if lanes is None:
        # Ragged element count: run the kernel on the 128-aligned prefix and
        # compute the (<128-element) tail with plain JAX -- no padded HBM
        # copies of x/z/d are materialized.
        # TODO(synk): fold the tail into the kernel's last tile with a masked
        # pltpu.store instead of the wrapper-side slice/concatenate.
        lanes = 128
    main = (total // lanes) * lanes
    rem = total - main
    rows = main // lanes

    def _slab(a):
        flat = a.reshape(-1)
        if rem:
            flat = flat[:main]
        return flat.reshape(rows, lanes)

    sublane = {4: 8, 2: 16, 1: 32}.get(itemsize, 8)   # dtype-dependent min sublane tile
    tile_bytes = _target_tile_bytes()
    target_rows = max(sublane, tile_bytes // (itemsize * lanes))
    tile_rows = _choose_tile_rows(rows, sublane, target_rows)
    grid = (pl.cdiv(rows, tile_rows),)

    # (3 inputs + 1 output) x 2 pipeline buffers; raise the scoped-VMEM limit so
    # big tiles are legal on every generation (v5e default is only 16 MiB), but
    # stay well under v7x's 64 MiB physical VMEM.
    pipeline_bytes = 8 * tile_rows * lanes * itemsize
    vmem_limit = int(min(48 << 20, max(32 << 20, pipeline_bytes + (8 << 20))))

    tile_spec = pl.BlockSpec((tile_rows, lanes), lambda i: (i, 0))

    out2d = pl.pallas_call(
        _d_block_kernel,
        out_shape=jax.ShapeDtypeStruct((rows, lanes), dtype),
        grid=grid,
        in_specs=[
            pl.BlockSpec(memory_space=pltpu.SMEM),    # eta (f32 scalar)
            tile_spec,                                # x
            tile_spec,                                # z
            tile_spec,                                # d
        ],
        out_specs=tile_spec,
        compiler_params=pltpu.CompilerParams(
            dimension_semantics=("parallel",),        # shard steps across TCs on v7x
            vmem_limit_bytes=vmem_limit,
        ),
        cost_estimate=pl.CostEstimate(
            flops=2 * main,
            transcendentals=0,
            bytes_accessed=4 * main * itemsize,       # 3 reads + 1 write
        ),
        input_output_aliases=({3: 0} if donate_d else {}),
    )(eta_smem, _slab(x), _slab(z), _slab(d))

    if rem:
        xf = x.reshape(-1)[main:].astype(jnp.float32)
        zf = z.reshape(-1)[main:].astype(jnp.float32)
        df = d.reshape(-1)[main:].astype(jnp.float32)
        tail = (df - eta_f32 * (xf - zf)).astype(dtype)
        return jnp.concatenate([out2d.reshape(-1), tail]).reshape(orig_shape)
    return out2d.reshape(orig_shape)


if __name__ == "__main__":
    key = jax.random.PRNGKey(0)

    # Deterministic parameter init, matching nn.Parameter(eta_init * ones(1)).
    eta_init = 1.0
    eta = jnp.full((1,), eta_init, dtype=jnp.float32)

    def _check(shape):
        kx, kz, kd = jax.random.split(jax.random.fold_in(key, sum(shape)), 3)
        x = jax.random.normal(kx, shape, dtype=jnp.float32)
        z = jax.random.normal(kz, shape, dtype=jnp.float32)
        d = jax.random.normal(kd, shape, dtype=jnp.float32)
        out = jax.block_until_ready(d_block_forward(x, z, d, eta))
        ref = d - eta[0] * (x - z)
        assert out.shape == shape and out.dtype == x.dtype
        assert jnp.allclose(out, ref, atol=1e-6, rtol=1e-6)

    # Small NCHW-like shape consistent with the module's usage (single tile).
    _check((2, 4, 16, 16))
    # Medium shape exercising the multi-step, evenly-divided grid path.
    _check((1, 16, 128, 128))
    # Ragged element count exercising the no-pad prefix + plain-JAX-tail path.
    _check((3, 5, 7, 9))

    print("KERNEL_OK")
</pallas_src>

<mosaic_0001>
module attributes {stable_mosaic.version = 11 : i64} {
  func.func @_d_block_kernel(%arg0: i32, %arg1: memref<1x1xf32, #tpu.memory_space<smem>>, %arg2: memref<8x256xf32, #tpu.memory_space<vmem>>, %arg3: memref<8x256xf32, #tpu.memory_space<vmem>>, %arg4: memref<8x256xf32, #tpu.memory_space<vmem>>, %arg5: memref<8x256xf32, #tpu.memory_space<vmem>>) attributes {dimension_semantics = [#tpu.dimension_semantics<parallel>], iteration_bounds = array<i64: 1>, scalar_prefetch = 0 : i64, scratch_operands = 0 : i64, tpu.core_type = #tpu.core_type<tc>, window_params = [{transform_indices = @transform_0, window_bounds = array<i64: 1, 1>}, {transform_indices = @transform_1, window_bounds = array<i64: 8, 256>}, {transform_indices = @transform_2, window_bounds = array<i64: 8, 256>}, {transform_indices = @transform_3, window_bounds = array<i64: 8, 256>}, {transform_indices = @transform_4, window_bounds = array<i64: 8, 256>}]} {
    %c0 = arith.constant 0 : index
    %c0_0 = arith.constant 0 : index
    %0 = memref.load %arg1[%c0, %c0_0] : memref<1x1xf32, #tpu.memory_space<smem>>
    %c0_1 = arith.constant 0 : index
    %c0_2 = arith.constant 0 : index
    %1 = vector.load %arg2[%c0_1, %c0_2] : memref<8x256xf32, #tpu.memory_space<vmem>>, vector<8x256xf32>
    %c0_3 = arith.constant 0 : index
    %c0_4 = arith.constant 0 : index
    %2 = vector.load %arg3[%c0_3, %c0_4] : memref<8x256xf32, #tpu.memory_space<vmem>>, vector<8x256xf32>
    %c0_5 = arith.constant 0 : index
    %c0_6 = arith.constant 0 : index
    %3 = vector.load %arg4[%c0_5, %c0_6] : memref<8x256xf32, #tpu.memory_space<vmem>>, vector<8x256xf32>
    %4 = arith.subf %1, %2 : vector<8x256xf32>
    %5 = vector.broadcast %0 : f32 to vector<8x256xf32>
    %6 = arith.mulf %5, %4 : vector<8x256xf32>
    %7 = arith.subf %3, %6 : vector<8x256xf32>
    %c0_7 = arith.constant 0 : index
    %c0_8 = arith.constant 0 : index
    %8 = vector.load %arg5[%c0_7, %c0_8] : memref<8x256xf32, #tpu.memory_space<vmem>>, vector<8x256xf32>
    tpu.vector_store %arg5[%c0_7, %c0_8], %7 {strides = array<i32>} : memref<8x256xf32, #tpu.memory_space<vmem>>, vector<8x256xf32>,
    return
  }
  func.func @transform_0(%arg0: i32) -> (i32, i32) {
    %c0_i32 = arith.constant 0 : i32
    %c0_i32_0 = arith.constant 0 : i32
    %c0_i32_1 = arith.constant 0 : i32
    return %c0_i32, %c0_i32_0 : i32, i32
  }
  func.func @transform_1(%arg0: i32) -> (i32, i32) {
    %c0_i32 = arith.constant 0 : i32
    %c0_i32_0 = arith.constant 0 : i32
    return %arg0, %c0_i32 : i32, i32
  }
  func.func @transform_2(%arg0: i32) -> (i32, i32) {
    %c0_i32 = arith.constant 0 : i32
    %c0_i32_0 = arith.constant 0 : i32
    return %arg0, %c0_i32 : i32, i32
  }
  func.func @transform_3(%arg0: i32) -> (i32, i32) {
    %c0_i32 = arith.constant 0 : i32
    %c0_i32_0 = arith.constant 0 : i32
    return %arg0, %c0_i32 : i32, i32
  }
  func.func @transform_4(%arg0: i32) -> (i32, i32) {
    %c0_i32 = arith.constant 0 : i32
    %c0_i32_0 = arith.constant 0 : i32
    return %arg0, %c0_i32 : i32, i32
  }
}

</mosaic_0001>

<llo_original>
// kernel: tpu_custom_call.1
$region0: #{tpu_custom_call.1}
  #allocation0 [shape = 'u32[]', space=smem, size = 0x4, offset = 0x4, fixed_abs, tag = 'smem constant byte address 0x4 - core index']
  #allocation1 [shape = 'u32[144,128]{1,0:T(1,128)}', space=vmem, size = 0x12000, scoped, tag = 'internal scratch']
  #allocation2 [shape = 'f32[1,1]{1,0:T(1,128)S(6)}', space=smem, size = 0x200, scoped, tag = 'scoped memory for tpu_custom_call.1']
  %s0 = inlined_call_operand.<no memory space> [shape: f32[1,1], index: 0, kind: input, shape index: {}]
  %s1 = inlined_call_operand.hbm [shape: f32[8,256], index: 1, kind: input, shape index: {}]
  %s2 = inlined_call_operand.hbm [shape: f32[8,256], index: 2, kind: input, shape index: {}]
  %s3 = inlined_call_operand.hbm [shape: f32[8,256], index: 3, kind: input, shape index: {}]
  %s4 = inlined_call_operand.hbm [shape: f32[8,256], index: 4, kind: output, shape index: {}]
  %s5 = sld [smem:[#allocation0]]
  $region38: #{tpu_custom_call.1} parent=0
    _
  %s7 = ssub.s32 1, %s5
  %s8 = scalar_select 0, %s7, %s5
  %9 = sst [smem:[#allocation2]] %s0
  $region1: #{tpu_custom_call.1} parent=0
    #allocation3 [shape = 'u8[8192]{0}', space=vmem, size = 0x2000, scoped, tag = 'input window, operand 1, single buffered']
    #allocation4 [shape = 's32[1]{0}', space=sflag, size = 0x4, scoped, tag = 'scoped memory for tpu_custom_call.1']
    #allocation5 [shape = 's32[1]{0}', space=sflag, size = 0x4, scoped, tag = 'scoped memory for tpu_custom_call.1']
    #allocation6 [shape = 'u8[8192]{0}', space=vmem, size = 0x2000, scoped, tag = 'input window, operand 2, single buffered']
    #allocation7 [shape = 's32[1]{0}', space=sflag, size = 0x4, scoped, tag = 'scoped memory for tpu_custom_call.1']
    #allocation8 [shape = 'u8[8192]{0}', space=vmem, size = 0x2000, scoped, tag = 'input window, operand 3, single buffered']
    #allocation9 [shape = 'u8[8192]{0}', space=vmem, size = 0x2000, scoped, tag = 'output window, operand 0, single buffered']
    %10 = vsyncpa [#allocation4], 0
    %11 = vsyncpa [#allocation7], 0
    %12 = vsyncpa [#allocation5], 0
    // Predicated region
    $region2: #{tpu_custom_call.1} parent=1 // pred_check
      _
    $region3: #{tpu_custom_call.1} parent=1 // pred_check_branch
      %14 = sbr.rel (0) target = $region5
    $region4: #{tpu_custom_call.1} parent=1 // pred_region
      _
    $region5: #{tpu_custom_call.1} parent=1 // pred_fallthru
      _
    // Predicated region
    $region6: #{tpu_custom_call.1} parent=1 // pred_check
      _
    $region7: #{tpu_custom_call.1} parent=1 // pred_check_branch
      %16 = sbr.rel (0) target = $region9
    $region8: #{tpu_custom_call.1} parent=1 // pred_region
      %s18 = ssub.s32 256, 256
      %19 = vsyncadd [#allocation4], %s18
      %s21 = sshll.u32 [#allocation3], 4
      %s22 = int_to_ptr.vmem [resolvable:$true] %s21
      %24 = dma.hbm_to_vmem [thread:$0]  %s1, 256, %s22, [#allocation4]
    $region9: #{tpu_custom_call.1} parent=1 // pred_fallthru
      _
    // Predicated region
    $region10: #{tpu_custom_call.1} parent=1 // pred_check
      _
    $region11: #{tpu_custom_call.1} parent=1 // pred_check_branch
      %26 = sbr.rel (0) target = $region13
    $region12: #{tpu_custom_call.1} parent=1 // pred_region
      %s28 = ssub.s32 256, 256
      %29 = vsyncadd [#allocation7], %s28
      %s31 = sshll.u32 [#allocation6], 4
      %s32 = int_to_ptr.vmem [resolvable:$true] %s31
      %34 = dma.hbm_to_vmem [thread:$0]  %s2, 256, %s32, [#allocation7]
    $region13: #{tpu_custom_call.1} parent=1 // pred_fallthru
      _
    // Predicated region
    $region14: #{tpu_custom_call.1} parent=1 // pred_check
      _
    $region15: #{tpu_custom_call.1} parent=1 // pred_check_branch
      %36 = sbr.rel (0) target = $region17
    $region16: #{tpu_custom_call.1} parent=1 // pred_region
      %s38 = ssub.s32 256, 256
      %39 = vsyncadd [#allocation7], %s38
      %s41 = sshll.u32 [#allocation8], 4
      %s42 = int_to_ptr.vmem [resolvable:$true] %s41
      %44 = dma.hbm_to_vmem [thread:$0]  %s3, 256, %s42, [#allocation7]
    $region17: #{tpu_custom_call.1} parent=1 // pred_fallthru
      _
    // Predicated region
    $region18: #{tpu_custom_call.1} parent=1 // pred_check
      _
    $region19: #{tpu_custom_call.1} parent=1 // pred_check_branch
      %46 = sbr.rel (0) target = $region21
    $region20: #{tpu_custom_call.1} parent=1 // pred_region
      %47 = dma.done [#allocation4], 256
    $region21: #{tpu_custom_call.1} parent=1 // pred_fallthru
      _
    // Predicated region
    $region22: #{tpu_custom_call.1} parent=1 // pred_check
      _
    $region23: #{tpu_custom_call.1} parent=1 // pred_check_branch
      %49 = sbr.rel (0) target = $region25
    $region24: #{tpu_custom_call.1} parent=1 // pred_region
      %50 = dma.done [#allocation7], 256
    $region25: #{tpu_custom_call.1} parent=1 // pred_fallthru
      _
    // Predicated region
    $region26: #{tpu_custom_call.1} parent=1 // pred_check
      _
    $region27: #{tpu_custom_call.1} parent=1 // pred_check_branch
      %52 = sbr.rel (0) target = $region29
    $region28: #{tpu_custom_call.1} parent=1 // pred_region
      %53 = dma.done [#allocation7], 256
    $region29: #{tpu_custom_call.1} parent=1 // pred_fallthru
      _
    %s54 = sld [smem:[#allocation2]]
    %v55 = vld [vmem:[#allocation3] sm:$0xff]
    %v56 = vld [vmem:[#allocation3 + $0x8] sm:$0xff]
    %v57 = vld [vmem:[#allocation6] sm:$0xff]
    %v58 = vld [vmem:[#allocation6 + $0x8] sm:$0xff]
    %v59 = vld [vmem:[#allocation8] sm:$0xff]
    %v60 = vld [vmem:[#allocation8 + $0x8] sm:$0xff]
    %v61 = vsub.f32 %v55, %v57
    %v62 = vsub.f32 %v56, %v58
    %v63 = vstv %s54
    %v64 = vmul.f32 %v63, %v61
    %v65 = vmul.f32 %v63, %v62
    %v66 = vsub.f32 %v59, %v64
    %v67 = vsub.f32 %v60, %v65
    %68 = vst [vmem:[#allocation9] sm:$0xff] %v66
    %69 = vst [vmem:[#allocation9 + $0x8] sm:$0xff] %v67
    // Predicated region
    $region30: #{tpu_custom_call.1} parent=1 // pred_check
      _
    $region31: #{tpu_custom_call.1} parent=1 // pred_check_branch
      %71 = sbr.rel (0) target = $region33
    $region32: #{tpu_custom_call.1} parent=1 // pred_region
      %s73 = ssub.s32 256, 256
      %74 = vsyncadd [#allocation5], %s73
      %s76 = sshll.u32 [#allocation9], 4
      %s77 = int_to_ptr.vmem [resolvable:$true] %s76
      %79 = dma.vmem_to_hbm [thread:$0]  %s77, 256, %s4, [#allocation5]
    $region33: #{tpu_custom_call.1} parent=1 // pred_fallthru
      _
    // Predicated region
    $region34: #{tpu_custom_call.1} parent=1 // pred_check
      _
    $region35: #{tpu_custom_call.1} parent=1 // pred_check_branch
      %81 = sbr.rel (0) target = $region37
    $region36: #{tpu_custom_call.1} parent=1 // pred_region
      %82 = dma.done [#allocation5], 256
    $region37: #{tpu_custom_call.1} parent=1 // pred_fallthru
      _
    %83 = vsyncpa [#allocation4], 1
    %84 = vsyncpa [#allocation7], 1
    %85 = vsyncpa [#allocation5], 1

</llo_original>
